<compile_context>
chip_gen: v7x
topology: tpu7x:2x2x1
jax: 0.10.0
libtpu: 0.0.40
codegen_flags: <defaults>
</compile_context>

<pallas_src>
import functools
import math

import jax
import jax.numpy as jnp
from jax.experimental import pallas as pl
from jax.experimental.pallas import tpu as pltpu

_LANE = 128
_SUBLANE = 8


def _round_up(x, m):
    return ((x + m - 1) // m) * m


def _actor_mean_kernel(x_ref, w1_ref, b1_ref, w2_ref, b2_ref, w3_ref, b3_ref,
                       mean_ref):
    """One batch tile of the 3-layer MLP; weights are resident across tiles."""
    x = x_ref[...]

    # l1 + ReLU
    a = jnp.dot(x, w1_ref[...], preferred_element_type=jnp.float32) + b1_ref[...]
    a = jnp.maximum(a, 0.0)

    # l2 + ReLU
    a = jnp.dot(a, w2_ref[...], preferred_element_type=jnp.float32) + b2_ref[...]
    a = jnp.maximum(a, 0.0)

    # l3 -> mean (lane-dense padded output; real A columns sliced in wrapper)
    mean = jnp.dot(a, w3_ref[...], preferred_element_type=jnp.float32) + b3_ref[...]
    mean_ref[...] = mean.astype(mean_ref.dtype)


@functools.partial(jax.jit, static_argnames=("block_b",))
def actor_forward(state, params, block_b=512):
    """Pallas-TPU forward of Actor: returns (mean, log_std, std).

    `params` are the lane-padded parameters from `pad_actor_params`.
    """
    w1, b1, w2, b2, w3, b3, log_std = params
    B, S = state.shape
    A = log_std.shape[1]          # true action dim
    H1P = w1.shape[1]
    H2P = w2.shape[1]
    AP = w3.shape[1]

    # Batch tile: multiple of the f32 sublane (8), capped at block_b so the
    # per-tile activations (~2.6 KB/row f32) stay small on v7x's 64 MiB VMEM.
    tb = min(block_b, _round_up(B, _SUBLANE))
    b_pad = _round_up(B, tb)
    if b_pad != B:
        state = jnp.pad(state, ((0, b_pad - B), (0, 0)))

    grid = (b_pad // tb,)

    mean_padded = pl.pallas_call(
        _actor_mean_kernel,
        out_shape=jax.ShapeDtypeStruct((b_pad, AP), jnp.float32),
        grid_spec=pltpu.PrefetchScalarGridSpec(
            num_scalar_prefetch=0,
            grid=grid,
            in_specs=[
                pl.BlockSpec((tb, S), lambda i: (i, 0)),        # x tile
                pl.BlockSpec((S, H1P), lambda i: (0, 0)),       # w1 (resident)
                pl.BlockSpec((1, H1P), lambda i: (0, 0)),       # b1
                pl.BlockSpec((H1P, H2P), lambda i: (0, 0)),     # w2
                pl.BlockSpec((1, H2P), lambda i: (0, 0)),       # b2
                pl.BlockSpec((H2P, AP), lambda i: (0, 0)),      # w3
                pl.BlockSpec((1, AP), lambda i: (0, 0)),        # b3
            ],
            out_specs=pl.BlockSpec((tb, AP), lambda i: (i, 0)),
        ),
        compiler_params=pltpu.CompilerParams(
            dimension_semantics=("parallel",),   # batch tiles independent -> 2 TCs on v7x
            vmem_limit_bytes=16 << 20,           # right-sized; actual need ~3 MiB at TB=512
        ),
    )(state, w1, b1, w2, b2, w3, b3)

    mean = mean_padded[:B, :A]
    log_std_b = jnp.broadcast_to(log_std, mean.shape)
    std = jnp.exp(log_std_b)
    return mean, log_std_b, std


def init_actor_params(key, state_space, action_space, hidden1=100, hidden2=500):
    """Unpadded params, mimicking nn.Linear default init (uniform +-1/sqrt(fan_in))."""
    def linear_init(key, fan_in, fan_out):
        k_w, k_b = jax.random.split(key)
        bound = 1.0 / math.sqrt(fan_in)
        # Stored as [in, out] (transpose of PyTorch's [out, in]).
        w = jax.random.uniform(k_w, (fan_in, fan_out), jnp.float32, -bound, bound)
        b = jax.random.uniform(k_b, (1, fan_out), jnp.float32, -bound, bound)
        return w, b

    k1, k2, k3 = jax.random.split(key, 3)
    w1, b1 = linear_init(k1, state_space, hidden1)
    w2, b2 = linear_init(k2, hidden1, hidden2)
    w3, b3 = linear_init(k3, hidden2, action_space)
    log_std = jnp.zeros((1, action_space), jnp.float32)  # nn.Parameter(torch.zeros(1, A))
    return (w1, b1, w2, b2, w3, b3, log_std)


def pad_actor_params(raw_params):
    """One-time zero-padding of feature dims to lane multiples of 128."""
    w1, b1, w2, b2, w3, b3, log_std = raw_params
    S = w1.shape[0]
    H1, H2, A = w1.shape[1], w2.shape[1], w3.shape[1]
    H1P, H2P, AP = (_round_up(d, _LANE) for d in (H1, H2, A))

    def pad2(x, rows, cols):
        return jnp.pad(x, ((0, rows - x.shape[0]), (0, cols - x.shape[1])))

    return (
        pad2(w1, S, H1P), pad2(b1, 1, H1P),
        pad2(w2, H1P, H2P), pad2(b2, 1, H2P),
        pad2(w3, H2P, AP), pad2(b3, 1, AP),
        log_std,                               # kept at true (1, A)
    )


def actor_reference(state, raw_params):
    """Pure-JAX reference on the UNPADDED params (checks padding correctness too)."""
    w1, b1, w2, b2, w3, b3, log_std = raw_params
    a = jnp.maximum(state @ w1 + b1, 0.0)
    a = jnp.maximum(a @ w2 + b2, 0.0)
    mean = a @ w3 + b3
    ls = jnp.broadcast_to(log_std, mean.shape)
    return mean, ls, jnp.exp(ls)


# TODO(synk): Actor.backup()/reference() (deepcopy of old modules) is pure
# parameter bookkeeping, not part of the forward graph; reuse actor_forward
# with a snapshot of the params instead.

if __name__ == "__main__":
    key = jax.random.PRNGKey(0)
    k_params, k_state = jax.random.split(key)

    batch = 8
    state_space = 32
    action_space = 8

    raw_params = init_actor_params(k_params, state_space, action_space)
    params = pad_actor_params(raw_params)
    state = jax.random.normal(k_state, (batch, state_space), jnp.float32)

    mean, log_std, std = actor_forward(state, params)
    jax.block_until_ready((mean, log_std, std))

    mean_r, log_std_r, std_r = actor_reference(state, raw_params)
    assert mean.shape == (batch, action_space)
    assert jnp.allclose(mean, mean_r, atol=1e-4, rtol=1e-4)
    assert jnp.allclose(log_std, log_std_r, atol=1e-6)
    assert jnp.allclose(std, std_r, atol=1e-6)

    print("KERNEL_OK")
</pallas_src>

<mosaic_0001>
module attributes {stable_mosaic.version = 11 : i64} {
  func.func @_actor_mean_kernel(%arg0: i32, %arg1: memref<8x32xf32, #tpu.memory_space<vmem>>, %arg2: memref<32x128xf32, #tpu.memory_space<vmem>>, %arg3: memref<1x128xf32, #tpu.memory_space<vmem>>, %arg4: memref<128x512xf32, #tpu.memory_space<vmem>>, %arg5: memref<1x512xf32, #tpu.memory_space<vmem>>, %arg6: memref<512x128xf32, #tpu.memory_space<vmem>>, %arg7: memref<1x128xf32, #tpu.memory_space<vmem>>, %arg8: memref<8x128xf32, #tpu.memory_space<vmem>>) attributes {dimension_semantics = [#tpu.dimension_semantics<parallel>], iteration_bounds = array<i64: 1>, scalar_prefetch = 0 : i64, scratch_operands = 0 : i64, tpu.core_type = #tpu.core_type<tc>, window_params = [{transform_indices = @transform_0, window_bounds = array<i64: 8, 32>}, {pipeline_mode = #tpu.pipeline_mode<synchronous>, transform_indices = @transform_1, window_bounds = array<i64: 32, 128>}, {pipeline_mode = #tpu.pipeline_mode<synchronous>, transform_indices = @transform_2, window_bounds = array<i64: 1, 128>}, {pipeline_mode = #tpu.pipeline_mode<synchronous>, transform_indices = @transform_3, window_bounds = array<i64: 128, 512>}, {pipeline_mode = #tpu.pipeline_mode<synchronous>, transform_indices = @transform_4, window_bounds = array<i64: 1, 512>}, {pipeline_mode = #tpu.pipeline_mode<synchronous>, transform_indices = @transform_5, window_bounds = array<i64: 512, 128>}, {pipeline_mode = #tpu.pipeline_mode<synchronous>, transform_indices = @transform_6, window_bounds = array<i64: 1, 128>}, {transform_indices = @transform_7, window_bounds = array<i64: 8, 128>}]} {
    %c0 = arith.constant 0 : index
    %c0_0 = arith.constant 0 : index
    %0 = vector.load %arg1[%c0, %c0_0] : memref<8x32xf32, #tpu.memory_space<vmem>>, vector<8x32xf32>
    %c0_1 = arith.constant 0 : index
    %c0_2 = arith.constant 0 : index
    %1 = vector.load %arg2[%c0_1, %c0_2] : memref<32x128xf32, #tpu.memory_space<vmem>>, vector<32x128xf32>
    %cst = arith.constant dense<0.000000e+00> : vector<8x128xf32>
    %2 = tpu.matmul %0, %1, %cst {dimension_numbers = #tpu.dot_dimension_numbers<[1], [0], [0], [1], [0, 0, 1, 1], [], []>} : vector<8x32xf32>, vector<32x128xf32>, vector<8x128xf32> -> vector<8x128xf32>
    %c0_3 = arith.constant 0 : index
    %c0_4 = arith.constant 0 : index
    %3 = vector.load %arg3[%c0_3, %c0_4] : memref<1x128xf32, #tpu.memory_space<vmem>>, vector<1x128xf32>
    %4 = vector.broadcast %3 : vector<1x128xf32> to vector<8x128xf32>
    %5 = arith.addf %2, %4 : vector<8x128xf32>
    %cst_5 = arith.constant 0.000000e+00 : f32
    %6 = vector.broadcast %cst_5 : f32 to vector<8x128xf32>
    %7 = arith.maximumf %5, %6 : vector<8x128xf32>
    %c0_6 = arith.constant 0 : index
    %c0_7 = arith.constant 0 : index
    %8 = vector.load %arg4[%c0_6, %c0_7] : memref<128x512xf32, #tpu.memory_space<vmem>>, vector<128x512xf32>
    %cst_8 = arith.constant dense<0.000000e+00> : vector<8x512xf32>
    %9 = tpu.matmul %7, %8, %cst_8 {dimension_numbers = #tpu.dot_dimension_numbers<[1], [0], [0], [1], [0, 0, 1, 1], [], []>} : vector<8x128xf32>, vector<128x512xf32>, vector<8x512xf32> -> vector<8x512xf32>
    %c0_9 = arith.constant 0 : index
    %c0_10 = arith.constant 0 : index
    %10 = vector.load %arg5[%c0_9, %c0_10] : memref<1x512xf32, #tpu.memory_space<vmem>>, vector<1x512xf32>
    %11 = vector.broadcast %10 : vector<1x512xf32> to vector<8x512xf32>
    %12 = arith.addf %9, %11 : vector<8x512xf32>
    %cst_11 = arith.constant 0.000000e+00 : f32
    %13 = vector.broadcast %cst_11 : f32 to vector<8x512xf32>
    %14 = arith.maximumf %12, %13 : vector<8x512xf32>
    %c0_12 = arith.constant 0 : index
    %c0_13 = arith.constant 0 : index
    %15 = vector.load %arg6[%c0_12, %c0_13] : memref<512x128xf32, #tpu.memory_space<vmem>>, vector<512x128xf32>
    %cst_14 = arith.constant dense<0.000000e+00> : vector<8x128xf32>
    %16 = tpu.matmul %14, %15, %cst_14 {dimension_numbers = #tpu.dot_dimension_numbers<[1], [0], [0], [1], [0, 0, 1, 1], [], []>} : vector<8x512xf32>, vector<512x128xf32>, vector<8x128xf32> -> vector<8x128xf32>
    %c0_15 = arith.constant 0 : index
    %c0_16 = arith.constant 0 : index
    %17 = vector.load %arg7[%c0_15, %c0_16] : memref<1x128xf32, #tpu.memory_space<vmem>>, vector<1x128xf32>
    %18 = vector.broadcast %17 : vector<1x128xf32> to vector<8x128xf32>
    %19 = arith.addf %16, %18 : vector<8x128xf32>
    %c0_17 = arith.constant 0 : index
    %c0_18 = arith.constant 0 : index
    %20 = vector.load %arg8[%c0_17, %c0_18] : memref<8x128xf32, #tpu.memory_space<vmem>>, vector<8x128xf32>
    tpu.vector_store %arg8[%c0_17, %c0_18], %19 {strides = array<i32>} : memref<8x128xf32, #tpu.memory_space<vmem>>, vector<8x128xf32>,
    return
  }
  func.func @transform_0(%arg0: i32) -> (i32, i32) {
    %c0_i32 = arith.constant 0 : i32
    %c0_i32_0 = arith.constant 0 : i32
    return %arg0, %c0_i32 : i32, i32
  }
  func.func @transform_1(%arg0: i32) -> (i32, i32) {
    %c0_i32 = arith.constant 0 : i32
    %c0_i32_0 = arith.constant 0 : i32
    %c0_i32_1 = arith.constant 0 : i32
    return %c0_i32, %c0_i32_0 : i32, i32
  }
  func.func @transform_2(%arg0: i32) -> (i32, i32) {
    %c0_i32 = arith.constant 0 : i32
    %c0_i32_0 = arith.constant 0 : i32
    %c0_i32_1 = arith.constant 0 : i32
    return %c0_i32, %c0_i32_0 : i32, i32
  }
  func.func @transform_3(%arg0: i32) -> (i32, i32) {
    %c0_i32 = arith.constant 0 : i32
    %c0_i32_0 = arith.constant 0 : i32
    %c0_i32_1 = arith.constant 0 : i32
    return %c0_i32, %c0_i32_0 : i32, i32
  }
  func.func @transform_4(%arg0: i32) -> (i32, i32) {
    %c0_i32 = arith.constant 0 : i32
    %c0_i32_0 = arith.constant 0 : i32
    %c0_i32_1 = arith.constant 0 : i32
    return %c0_i32, %c0_i32_0 : i32, i32
  }
  func.func @transform_5(%arg0: i32) -> (i32, i32) {
    %c0_i32 = arith.constant 0 : i32
    %c0_i32_0 = arith.constant 0 : i32
    %c0_i32_1 = arith.constant 0 : i32
    return %c0_i32, %c0_i32_0 : i32, i32
  }
  func.func @transform_6(%arg0: i32) -> (i32, i32) {
    %c0_i32 = arith.constant 0 : i32
    %c0_i32_0 = arith.constant 0 : i32
    %c0_i32_1 = arith.constant 0 : i32
    return %c0_i32, %c0_i32_0 : i32, i32
  }
  func.func @transform_7(%arg0: i32) -> (i32, i32) {
    %c0_i32 = arith.constant 0 : i32
    %c0_i32_0 = arith.constant 0 : i32
    return %arg0, %c0_i32 : i32, i32
  }
}

</mosaic_0001>

<llo_original>
// kernel: actor_forward.1
$region0: #{actor_forward.1}
  #allocation0 [shape = 'u32[]', space=smem, size = 0x4, offset = 0x4, fixed_abs, tag = 'smem constant byte address 0x4 - core index']
  #allocation1 [shape = 'u32[144,128]{1,0:T(1,128)}', space=vmem, size = 0x12000, scoped, tag = 'internal scratch']
  %s0 = inlined_call_operand.vmem [shape: f32[8,32], index: 0, kind: input, shape index: {}]
  %s1 = inlined_call_operand.hbm [shape: f32[32,128], index: 1, kind: input, shape index: {}]
  %s2 = inlined_call_operand.vmem [shape: f32[1,128], index: 2, kind: input, shape index: {}]
  %s3 = inlined_call_operand.hbm [shape: f32[128,512], index: 3, kind: input, shape index: {}]
  %s4 = inlined_call_operand.vmem [shape: f32[1,512], index: 4, kind: input, shape index: {}]
  %s5 = inlined_call_operand.hbm [shape: f32[512,128], index: 5, kind: input, shape index: {}]
  %s6 = inlined_call_operand.vmem [shape: f32[1,128], index: 6, kind: input, shape index: {}]
  %s7 = inlined_call_operand.hbm [shape: f32[8,128], index: 7, kind: output, shape index: {}]
  %s8 = sld [smem:[#allocation0]]
  $region50: #{actor_forward.1} parent=0
    _
  %s10 = ssub.s32 1, %s8
  %s11 = scalar_select 0, %s10, %s8
  $region1: #{actor_forward.1} parent=0
    #allocation2 [shape = 'u8[16384]{0}', space=vmem, size = 0x4000, scoped, tag = 'input window, operand 1, single buffered']
    #allocation3 [shape = 's32[1]{0}', space=sflag, size = 0x4, scoped, tag = 'scoped memory for actor_forward.1']
    #allocation4 [shape = 's32[1]{0}', space=sflag, size = 0x4, scoped, tag = 'scoped memory for actor_forward.1']
    #allocation5 [shape = 'u8[262144]{0}', space=vmem, size = 0x40000, scoped, tag = 'input window, operand 3, single buffered']
    #allocation6 [shape = 's32[1]{0}', space=sflag, size = 0x4, scoped, tag = 'scoped memory for actor_forward.1']
    #allocation7 [shape = 'u8[262144]{0}', space=vmem, size = 0x40000, scoped, tag = 'input window, operand 5, single buffered']
    #allocation8 [shape = 'u8[4096]{0}', space=vmem, size = 0x1000, scoped, tag = 'output window, operand 0, single buffered']
    %12 = vsyncpa [#allocation3], 0
    %13 = vsyncpa [#allocation6], 0
    %14 = vsyncpa [#allocation4], 0
    // Predicated region
    $region2: #{actor_forward.1} parent=1 // pred_check
      _
    $region3: #{actor_forward.1} parent=1 // pred_check_branch
      %16 = sbr.rel (0) target = $region5
    $region4: #{actor_forward.1} parent=1 // pred_region
      _
    $region5: #{actor_forward.1} parent=1 // pred_fallthru
      _
    // Predicated region
    $region6: #{actor_forward.1} parent=1 // pred_check
      _
    $region7: #{actor_forward.1} parent=1 // pred_check_branch
      %18 = sbr.rel (0) target = $region9
    $region8: #{actor_forward.1} parent=1 // pred_region
      %s20 = ssub.s32 512, 512
      %21 = vsyncadd [#allocation3], %s20
      %s22 = sshll.u32 [#allocation2], 4
      %s23 = int_to_ptr.vmem [resolvable:$true] %s22
      %28 = dma.hbm_to_vmem [thread:$0]  %s1, 512, %s23, [#allocation3], 128, 128, 8
    $region9: #{actor_forward.1} parent=1 // pred_fallthru
      _
    // Predicated region
    $region10: #{actor_forward.1} parent=1 // pred_check
      _
    $region11: #{actor_forward.1} parent=1 // pred_check_branch
      %30 = sbr.rel (0) target = $region13
    $region12: #{actor_forward.1} parent=1 // pred_region
      _
    $region13: #{actor_forward.1} parent=1 // pred_fallthru
      _
    // Predicated region
    $region14: #{actor_forward.1} parent=1 // pred_check
      _
    $region15: #{actor_forward.1} parent=1 // pred_check_branch
      %32 = sbr.rel (0) target = $region17
    $region16: #{actor_forward.1} parent=1 // pred_region
      %s34 = ssub.s32 8192, 8192
      %35 = vsyncadd [#allocation6], %s34
      %s36 = sshll.u32 [#allocation5], 4
      %s37 = int_to_ptr.vmem [resolvable:$true] %s36
      %42 = dma.hbm_to_vmem [thread:$0]  %s3, 8192, %s37, [#allocation6], 512, 512, 32
    $region17: #{actor_forward.1} parent=1 // pred_fallthru
      _
    // Predicated region
    $region18: #{actor_forward.1} parent=1 // pred_check
      _
    $region19: #{actor_forward.1} parent=1 // pred_check_branch
      %44 = sbr.rel (0) target = $region21
    $region20: #{actor_forward.1} parent=1 // pred_region
      _
    $region21: #{actor_forward.1} parent=1 // pred_fallthru
      _
    // Predicated region
    $region22: #{actor_forward.1} parent=1 // pred_check
      _
    $region23: #{actor_forward.1} parent=1 // pred_check_branch
      %46 = sbr.rel (0) target = $region25
    $region24: #{actor_forward.1} parent=1 // pred_region
      %s48 = ssub.s32 8192, 8192
      %49 = vsyncadd [#allocation6], %s48
      %s50 = sshll.u32 [#allocation7], 4
      %s51 = int_to_ptr.vmem [resolvable:$true] %s50
      %56 = dma.hbm_to_vmem [thread:$0]  %s5, 8192, %s51, [#allocation6], 128, 128, 8
    $region25: #{actor_forward.1} parent=1 // pred_fallthru
      _
    // Predicated region
    $region26: #{actor_forward.1} parent=1 // pred_check
      _
    $region27: #{actor_forward.1} parent=1 // pred_check_branch
      %58 = sbr.rel (0) target = $region29
    $region28: #{actor_forward.1} parent=1 // pred_region
      _
    $region29: #{actor_forward.1} parent=1 // pred_fallthru
      _
    // Predicated region
    $region30: #{actor_forward.1} parent=1 // pred_check
      _
    $region31: #{actor_forward.1} parent=1 // pred_check_branch
      %60 = sbr.rel (0) target = $region33
    $region32: #{actor_forward.1} parent=1 // pred_region
      %61 = dma.done [#allocation3], 512
    $region33: #{actor_forward.1} parent=1 // pred_fallthru
      _
    // Predicated region
    $region34: #{actor_forward.1} parent=1 // pred_check
      _
    $region35: #{actor_forward.1} parent=1 // pred_check_branch
      %63 = sbr.rel (0) target = $region37
    $region36: #{actor_forward.1} parent=1 // pred_region
      %64 = dma.done [#allocation6], 8192
    $region37: #{actor_forward.1} parent=1 // pred_fallthru
      _
    // Predicated region
    $region38: #{actor_forward.1} parent=1 // pred_check
      _
    $region39: #{actor_forward.1} parent=1 // pred_check_branch
      %66 = sbr.rel (0) target = $region41
    $region40: #{actor_forward.1} parent=1 // pred_region
      %67 = dma.done [#allocation6], 8192
    $region41: #{actor_forward.1} parent=1 // pred_fallthru
      _
    %v68 = vld [vmem:[%s0] sm:$0xff]
    %v69 = vld [vmem:[#allocation2] sm:$0xff]
    %v70 = vld [vmem:[#allocation2 + $0x8] sm:$0xff]
    %v71 = vld [vmem:[#allocation2 + $0x10] sm:$0xff]
    %v72 = vld [vmem:[#allocation2 + $0x18] sm:$0xff]
    %v73 = vld [vmem:[%s2] sm:$0x1]
    %v75 = vlaneseq
    %v76 = vshrl.u32 %v75, 7
    %v77 = vsub.s32 0, %v76
    %v78 = vrot.slane %v73, %v77
    %vm80 = vcmask 261120
    %v82 = vsel %vm80, %v68, 0
    %84 = vmatprep.subr.mxu0 0.0
    %85 = vmatpush1.msra.mxu0 %v69
    %86 = vmatprep.subr.mxu0 0.0
    %87 = vmatpush1.msra.mxu0 %v70
    %88 = vmatprep.subr.mxu0 0.0
    %89 = vmatpush1.msra.mxu0 %v71
    %90 = vmatprep.subr.mxu0 0.0
    %91 = vmatpush1.msra.mxu0 %v72
    %92 = vmatprep.subr.mxu0 0.0
    %93 = vmatpush1.msra.mxu0 0.0
    %94 = vmatprep.subr.mxu0 0.0
    %95 = vmatpush1.msra.mxu0 0.0
    %96 = vmatprep.subr.mxu0 0.0
    %97 = vmatpush1.msra.mxu0 0.0
    %98 = vmatprep.subr.mxu0 0.0
    %99 = vmatpush1.msra.mxu0 0.0
    %100 = vmatprep.subr.mxu0 0.0
    %101 = vmatpush1.msra.mxu0 0.0
    %102 = vmatprep.subr.mxu0 0.0
    %103 = vmatpush1.msra.mxu0 0.0
    %104 = vmatprep.subr.mxu0 0.0
    %105 = vmatpush1.msra.mxu0 0.0
    %106 = vmatprep.subr.mxu0 0.0
    %107 = vmatpush1.msra.mxu0 0.0
    %108 = vmatprep.subr.mxu0 0.0
    %109 = vmatpush1.msra.mxu0 0.0
    %110 = vmatprep.subr.mxu0 0.0
    %111 = vmatpush1.msra.mxu0 0.0
    %112 = vmatprep.subr.mxu0 0.0
    %113 = vmatpush1.msra.mxu0 0.0
    %114 = vmatprep.subr.mxu0 0.0
    %115 = vmatpush1.msra.mxu0 0.0
    %116 = vmatprep.subr.mxu0 0.0
    %117 = vmatpush1.msra.mxu0 0.0
    %118 = vmatprep.subr.mxu0 0.0
    %119 = vmatpush1.msra.mxu0 0.0
    %120 = vmatprep.subr.mxu0 0.0
    %121 = vmatpush1.msra.mxu0 0.0
    %122 = vmatprep.subr.mxu0 0.0
    %123 = vmatpush1.msra.mxu0 0.0
    %124 = vmatprep.subr.mxu0 0.0
    %125 = vmatpush1.msra.mxu0 0.0
    %126 = vmatprep.subr.mxu0 0.0
    %127 = vmatpush1.msra.mxu0 0.0
    %128 = vmatprep.subr.mxu0 0.0
    %129 = vmatpush1.msra.mxu0 0.0
    %130 = vmatprep.subr.mxu0 0.0
    %131 = vmatpush1.msra.mxu0 0.0
    %132 = vmatprep.subr.mxu0 0.0
    %133 = vmatpush1.msra.mxu0 0.0
    %134 = vmatprep.subr.mxu0 0.0
    %135 = vmatpush1.msra.mxu0 0.0
    %136 = vmatprep.subr.mxu0 0.0
    %137 = vmatpush1.msra.mxu0 0.0
    %138 = vmatprep.subr.mxu0 0.0
    %139 = vmatpush1.msra.mxu0 0.0
    %140 = vmatprep.subr.mxu0 0.0
    %141 = vmatpush1.msra.mxu0 0.0
    %142 = vmatprep.subr.mxu0 0.0
    %143 = vmatpush1.msra.mxu0 0.0
    %144 = vmatprep.subr.mxu0 0.0
    %145 = vmatpush1.msra.mxu0 0.0
    %146 = vmatprep.subr.mxu0 0.0
    %147 = vmatpush1.msra.mxu0 0.0
    %148 = vmatprep.mubr.f32.mxu0 0.0
    %149 = vmatmul.mubr.f32.gmra.mrb[0].mxu0 %v82
    %v150 = vpop.f32.mrb[0].mxu0
    %v151 = vadd.f32 %v78, %v150
    %v152 = vpop.f32.mrb[0].mxu0
    %153 = vdwg.mxu0
    %v154 = vmax.f32 %v151, 0.0
    %v155 = vld [vmem:[#allocation5] sm:$0xff]
    %v156 = vld [vmem:[#allocation5 + $0x8] sm:$0xff]
    %v157 = vld [vmem:[#allocation5 + $0x10] sm:$0xff]
    %v158 = vld [vmem:[#allocation5 + $0x18] sm:$0xff]
    %v159 = vld [vmem:[#allocation5 + $0x20] sm:$0xff]
    %v160 = vld [vmem:[#allocation5 + $0x28] sm:$0xff]
    %v161 = vld [vmem:[#allocation5 + $0x30] sm:$0xff]
    %v162 = vld [vmem:[#allocation5 + $0x38] sm:$0xff]
    %v163 = vld [vmem:[#allocation5 + $0x40] sm:$0xff]
    %v164 = vld [vmem:[#allocation5 + $0x48] sm:$0xff]
    %v165 = vld [vmem:[#allocation5 + $0x50] sm:$0xff]
    %v166 = vld [vmem:[#allocation5 + $0x58] sm:$0xff]
    %v167 = vld [vmem:[#allocation5 + $0x60] sm:$0xff]
    %v168 = vld [vmem:[#allocation5 + $0x68] sm:$0xff]
    %v169 = vld [vmem:[#allocation5 + $0x70] sm:$0xff]
    %v170 = vld [vmem:[#allocation5 + $0x78] sm:$0xff]
    %v171 = vld [vmem:[#allocation5 + $0x80] sm:$0xff]
    %v172 = vld [vmem:[#allocation5 + $0x88] sm:$0xff]
    %v173 = vld [vmem:[#allocation5 + $0x90] sm:$0xff]
    %v174 = vld [vmem:[#allocation5 + $0x98] sm:$0xff]
    %v175 = vld [vmem:[#allocation5 + $0xa0] sm:$0xff]
    %v176 = vld [vmem:[#allocation5 + $0xa8] sm:$0xff]
    %v177 = vld [vmem:[#allocation5 + $0xb0] sm:$0xff]
    %v178 = vld [vmem:[#allocation5 + $0xb8] sm:$0xff]
    %v179 = vld [vmem:[#allocation5 + $0xc0] sm:$0xff]
    %v180 = vld [vmem:[#allocation5 + $0xc8] sm:$0xff]
    %v181 = vld [vmem:[#allocation5 + $0xd0] sm:$0xff]
    %v182 = vld [vmem:[#allocation5 + $0xd8] sm:$0xff]
    %v183 = vld [vmem:[#allocation5 + $0xe0] sm:$0xff]
    %v184 = vld [vmem:[#allocation5 + $0xe8] sm:$0xff]
    %v185 = vld [vmem:[#allocation5 + $0xf0] sm:$0xff]
    %v186 = vld [vmem:[#allocation5 + $0xf8] sm:$0xff]
    %v187 = vld [vmem:[#allocation5 + $0x100] sm:$0xff]
    %v188 = vld [vmem:[#allocation5 + $0x108] sm:$0xff]
    %v189 = vld [vmem:[#allocation5 + $0x110] sm:$0xff]
    %v190 = vld [vmem:[#allocation5 + $0x118] sm:$0xff]
    %v191 = vld [vmem:[#allocation5 + $0x120] sm:$0xff]
    %v192 = vld [vmem:[#allocation5 + $0x128] sm:$0xff]
    %v193 = vld [vmem:[#allocation5 + $0x130] sm:$0xff]
    %v194 = vld [vmem:[#allocation5 + $0x138] sm:$0xff]
    %v195 = vld [vmem:[#allocation5 + $0x140] sm:$0xff]
    %v196 = vld [vmem:[#allocation5 + $0x148] sm:$0xff]
    %v197 = vld [vmem:[#allocation5 + $0x150] sm:$0xff]
    %v198 = vld [vmem:[#allocation5 + $0x158] sm:$0xff]
    %v199 = vld [vmem:[#allocation5 + $0x160] sm:$0xff]
    %v200 = vld [vmem:[#allocation5 + $0x168] sm:$0xff]
    %v201 = vld [vmem:[#allocation5 + $0x170] sm:$0xff]
    %v202 = vld [vmem:[#allocation5 + $0x178] sm:$0xff]
    %v203 = vld [vmem:[#allocation5 + $0x180] sm:$0xff]
    %v204 = vld [vmem:[#allocation5 + $0x188] sm:$0xff]
    %v205 = vld [vmem:[#allocation5 + $0x190] sm:$0xff]
    %v206 = vld [vmem:[#allocation5 + $0x198] sm:$0xff]
    %v207 = vld [vmem:[#allocation5 + $0x1a0] sm:$0xff]
    %v208 = vld [vmem:[#allocation5 + $0x1a8] sm:$0xff]
    %v209 = vld [vmem:[#allocation5 + $0x1b0] sm:$0xff]
    %v210 = vld [vmem:[#allocation5 + $0x1b8] sm:$0xff]
    %v211 = vld [vmem:[#allocation5 + $0x1c0] sm:$0xff]
    %v212 = vld [vmem:[#allocation5 + $0x1c8] sm:$0xff]
    %v213 = vld [vmem:[#allocation5 + $0x1d0] sm:$0xff]
    %v214 = vld [vmem:[#allocation5 + $0x1d8] sm:$0xff]
    %v215 = vld [vmem:[#allocation5 + $0x1e0] sm:$0xff]
    %v216 = vld [vmem:[#allocation5 + $0x1e8] sm:$0xff]
    %v217 = vld [vmem:[#allocation5 + $0x1f0] sm:$0xff]
    %v218 = vld [vmem:[#allocation5 + $0x1f8] sm:$0xff]
    %v219 = vld [vmem:[%s4] sm:$0xf]
    %v221 = vlaneseq
    %v222 = vshrl.u32 %v221, 7
    %v223 = vsub.s32 0, %v222
    %v224 = vrot.slane %v219, %v223
    %v225 = vlaneseq
    %v226 = vshrl.u32 %v225, 7
    %v227 = vsub.s32 1, %v226
    %v228 = vrot.slane %v219, %v227
    %v229 = vlaneseq
    %v230 = vshrl.u32 %v229, 7
    %v231 = vsub.s32 2, %v230
    %v232 = vrot.slane %v219, %v231
    %v233 = vlaneseq
    %v234 = vshrl.u32 %v233, 7
    %v235 = vsub.s32 3, %v234
    %v236 = vrot.slane %v219, %v235
    %241 = vmatprep.subr.mxu0 %v156
    %242 = vmatpush1.msra.mxu0 %v155
    %243 = vmatprep.subr.mxu0 %v160
    %244 = vmatpush1.msra.mxu0 %v159
    %245 = vmatprep.subr.mxu0 %v164
    %246 = vmatpush1.msra.mxu0 %v163
    %247 = vmatprep.subr.mxu0 %v168
    %248 = vmatpush1.msra.mxu0 %v167
    %249 = vmatprep.subr.mxu0 %v172
    %250 = vmatpush1.msra.mxu0 %v171
    %251 = vmatprep.subr.mxu0 %v176
    %252 = vmatpush1.msra.mxu0 %v175
    %253 = vmatprep.subr.mxu0 %v180
    %254 = vmatpush1.msra.mxu0 %v179
    %255 = vmatprep.subr.mxu0 %v184
    %256 = vmatpush1.msra.mxu0 %v183
    %257 = vmatprep.subr.mxu0 %v188
    %258 = vmatpush1.msra.mxu0 %v187
    %259 = vmatprep.subr.mxu0 %v192
    %260 = vmatpush1.msra.mxu0 %v191
    %261 = vmatprep.subr.mxu0 %v196
    %262 = vmatpush1.msra.mxu0 %v195
    %263 = vmatprep.subr.mxu0 %v200
    %264 = vmatpush1.msra.mxu0 %v199
    %265 = vmatprep.subr.mxu0 %v204
    %266 = vmatpush1.msra.mxu0 %v203
    %267 = vmatprep.subr.mxu0 %v208
    %268 = vmatpush1.msra.mxu0 %v207
    %269 = vmatprep.subr.mxu0 %v212
    %270 = vmatpush1.msra.mxu0 %v211
    %271 = vmatprep.subr.mxu0 %v216
    %272 = vmatpush1.msra.mxu0 %v215
    %273 = vmatprep.subr.mxu0 0.0
    %274 = vmatpush1.msra.mxu0 0.0
    %275 = vmatprep.subr.mxu0 0.0
    %276 = vmatpush1.msra.mxu0 0.0
    %277 = vmatprep.subr.mxu0 0.0
    %278 = vmatpush1.msra.mxu0 0.0
    %279 = vmatprep.subr.mxu0 0.0
    %280 = vmatpush1.msra.mxu0 0.0
    %281 = vmatprep.subr.mxu0 0.0
    %282 = vmatpush1.msra.mxu0 0.0
    %283 = vmatprep.subr.mxu0 0.0
    %284 = vmatpush1.msra.mxu0 0.0
    %285 = vmatprep.subr.mxu0 0.0
    %286 = vmatpush1.msra.mxu0 0.0
    %287 = vmatprep.subr.mxu0 0.0
    %288 = vmatpush1.msra.mxu0 0.0
    %289 = vmatprep.subr.mxu0 0.0
    %290 = vmatpush1.msra.mxu0 0.0
    %291 = vmatprep.subr.mxu0 0.0
    %292 = vmatpush1.msra.mxu0 0.0
    %293 = vmatprep.subr.mxu0 0.0
    %294 = vmatpush1.msra.mxu0 0.0
    %295 = vmatprep.subr.mxu0 0.0
    %296 = vmatpush1.msra.mxu0 0.0
    %297 = vmatprep.subr.mxu0 0.0
    %298 = vmatpush1.msra.mxu0 0.0
    %299 = vmatprep.subr.mxu0 0.0
    %300 = vmatpush1.msra.mxu0 0.0
    %301 = vmatprep.subr.mxu0 0.0
    %302 = vmatpush1.msra.mxu0 0.0
    %303 = vmatprep.subr.mxu0 0.0
    %304 = vmatpush1.msra.mxu0 0.0
    %305 = vmatprep.mubr.f32.mxu0 0.0
    %306 = vmatmul.mubr.f32.gmra.mrb[0].mxu0 %v154
    %v307 = vpop.f32.mrb[0].mxu0
    %v308 = vadd.f32 %v224, %v307
    %v309 = vpop.f32.mrb[0].mxu0
    %v310 = vadd.f32 %v228, %v309
    %311 = vdwg.mxu0
    %312 = vmatprep.subr.mxu0 %v158
    %313 = vmatpush1.msra.mxu0 %v157
    %314 = vmatprep.subr.mxu0 %v162
    %315 = vmatpush1.msra.mxu0 %v161
    %316 = vmatprep.subr.mxu0 %v166
    %317 = vmatpush1.msra.mxu0 %v165
    %318 = vmatprep.subr.mxu0 %v170
    %319 = vmatpush1.msra.mxu0 %v169
    %320 = vmatprep.subr.mxu0 %v174
    %321 = vmatpush1.msra.mxu0 %v173
    %322 = vmatprep.subr.mxu0 %v178
    %323 = vmatpush1.msra.mxu0 %v177
    %324 = vmatprep.subr.mxu0 %v182
    %325 = vmatpush1.msra.mxu0 %v181
    %326 = vmatprep.subr.mxu0 %v186
    %327 = vmatpush1.msra.mxu0 %v185
    %328 = vmatprep.subr.mxu0 %v190
    %329 = vmatpush1.msra.mxu0 %v189
    %330 = vmatprep.subr.mxu0 %v194
    %331 = vmatpush1.msra.mxu0 %v193
    %332 = vmatprep.subr.mxu0 %v198
    %333 = vmatpush1.msra.mxu0 %v197
    %334 = vmatprep.subr.mxu0 %v202
    %335 = vmatpush1.msra.mxu0 %v201
    %336 = vmatprep.subr.mxu0 %v206
    %337 = vmatpush1.msra.mxu0 %v205
    %338 = vmatprep.subr.mxu0 %v210
    %339 = vmatpush1.msra.mxu0 %v209
    %340 = vmatprep.subr.mxu0 %v214
    %341 = vmatpush1.msra.mxu0 %v213
    %342 = vmatprep.subr.mxu0 %v218
    %343 = vmatpush1.msra.mxu0 %v217
    %344 = vmatprep.subr.mxu0 0.0
    %345 = vmatpush1.msra.mxu0 0.0
    %346 = vmatprep.subr.mxu0 0.0
    %347 = vmatpush1.msra.mxu0 0.0
    %348 = vmatprep.subr.mxu0 0.0
    %349 = vmatpush1.msra.mxu0 0.0
    %350 = vmatprep.subr.mxu0 0.0
    %351 = vmatpush1.msra.mxu0 0.0
    %352 = vmatprep.subr.mxu0 0.0
    %353 = vmatpush1.msra.mxu0 0.0
    %354 = vmatprep.subr.mxu0 0.0
    %355 = vmatpush1.msra.mxu0 0.0
    %356 = vmatprep.subr.mxu0 0.0
    %357 = vmatpush1.msra.mxu0 0.0
    %358 = vmatprep.subr.mxu0 0.0
    %359 = vmatpush1.msra.mxu0 0.0
    %360 = vmatprep.subr.mxu0 0.0
    %361 = vmatpush1.msra.mxu0 0.0
    %362 = vmatprep.subr.mxu0 0.0
    %363 = vmatpush1.msra.mxu0 0.0
    %364 = vmatprep.subr.mxu0 0.0
    %365 = vmatpush1.msra.mxu0 0.0
    %366 = vmatprep.subr.mxu0 0.0
    %367 = vmatpush1.msra.mxu0 0.0
    %368 = vmatprep.subr.mxu0 0.0
    %369 = vmatpush1.msra.mxu0 0.0
    %370 = vmatprep.subr.mxu0 0.0
    %371 = vmatpush1.msra.mxu0 0.0
    %372 = vmatprep.subr.mxu0 0.0
    %373 = vmatpush1.msra.mxu0 0.0
    %374 = vmatprep.subr.mxu0 0.0
    %375 = vmatpush1.msra.mxu0 0.0
    %376 = vmatprep.mubr.f32.mxu0 0.0
    %377 = vmatmul.mubr.f32.gmra.mrb[0].mxu0 %v154
    %v378 = vpop.f32.mrb[0].mxu0
    %v379 = vadd.f32 %v232, %v378
    %v380 = vpop.f32.mrb[0].mxu0
    %v381 = vadd.f32 %v236, %v380
    %382 = vdwg.mxu0
    %v383 = vmax.f32 %v308, 0.0
    %v384 = vmax.f32 %v310, 0.0
    %v385 = vmax.f32 %v379, 0.0
    %v386 = vmax.f32 %v381, 0.0
    %v387 = vld [vmem:[#allocation7] sm:$0xff]
    %v388 = vld [vmem:[#allocation7 + $0x8] sm:$0xff]
    %v389 = vld [vmem:[#allocation7 + $0x10] sm:$0xff]
    %v390 = vld [vmem:[#allocation7 + $0x18] sm:$0xff]
    %v391 = vld [vmem:[#allocation7 + $0x20] sm:$0xff]
    %v392 = vld [vmem:[#allocation7 + $0x28] sm:$0xff]
    %v393 = vld [vmem:[#allocation7 + $0x30] sm:$0xff]
    %v394 = vld [vmem:[#allocation7 + $0x38] sm:$0xff]
    %v395 = vld [vmem:[#allocation7 + $0x40] sm:$0xff]
    %v396 = vld [vmem:[#allocation7 + $0x48] sm:$0xff]
    %v397 = vld [vmem:[#allocation7 + $0x50] sm:$0xff]
    %v398 = vld [vmem:[#allocation7 + $0x58] sm:$0xff]
    %v399 = vld [vmem:[#allocation7 + $0x60] sm:$0xff]
    %v400 = vld [vmem:[#allocation7 + $0x68] sm:$0xff]
    %v401 = vld [vmem:[#allocation7 + $0x70] sm:$0xff]
    %v402 = vld [vmem:[#allocation7 + $0x78] sm:$0xff]
    %v403 = vld [vmem:[#allocation7 + $0x80] sm:$0xff]
    %v404 = vld [vmem:[#allocation7 + $0x88] sm:$0xff]
    %v405 = vld [vmem:[#allocation7 + $0x90] sm:$0xff]
    %v406 = vld [vmem:[#allocation7 + $0x98] sm:$0xff]
    %v407 = vld [vmem:[#allocation7 + $0xa0] sm:$0xff]
    %v408 = vld [vmem:[#allocation7 + $0xa8] sm:$0xff]
    %v409 = vld [vmem:[#allocation7 + $0xb0] sm:$0xff]
    %v410 = vld [vmem:[#allocation7 + $0xb8] sm:$0xff]
    %v411 = vld [vmem:[#allocation7 + $0xc0] sm:$0xff]
    %v412 = vld [vmem:[#allocation7 + $0xc8] sm:$0xff]
    %v413 = vld [vmem:[#allocation7 + $0xd0] sm:$0xff]
    %v414 = vld [vmem:[#allocation7 + $0xd8] sm:$0xff]
    %v415 = vld [vmem:[#allocation7 + $0xe0] sm:$0xff]
    %v416 = vld [vmem:[#allocation7 + $0xe8] sm:$0xff]
    %v417 = vld [vmem:[#allocation7 + $0xf0] sm:$0xff]
    %v418 = vld [vmem:[#allocation7 + $0xf8] sm:$0xff]
    %v419 = vld [vmem:[#allocation7 + $0x100] sm:$0xff]
    %v420 = vld [vmem:[#allocation7 + $0x108] sm:$0xff]
    %v421 = vld [vmem:[#allocation7 + $0x110] sm:$0xff]
    %v422 = vld [vmem:[#allocation7 + $0x118] sm:$0xff]
    %v423 = vld [vmem:[#allocation7 + $0x120] sm:$0xff]
    %v424 = vld [vmem:[#allocation7 + $0x128] sm:$0xff]
    %v425 = vld [vmem:[#allocation7 + $0x130] sm:$0xff]
    %v426 = vld [vmem:[#allocation7 + $0x138] sm:$0xff]
    %v427 = vld [vmem:[#allocation7 + $0x140] sm:$0xff]
    %v428 = vld [vmem:[#allocation7 + $0x148] sm:$0xff]
    %v429 = vld [vmem:[#allocation7 + $0x150] sm:$0xff]
    %v430 = vld [vmem:[#allocation7 + $0x158] sm:$0xff]
    %v431 = vld [vmem:[#allocation7 + $0x160] sm:$0xff]
    %v432 = vld [vmem:[#allocation7 + $0x168] sm:$0xff]
    %v433 = vld [vmem:[#allocation7 + $0x170] sm:$0xff]
    %v434 = vld [vmem:[#allocation7 + $0x178] sm:$0xff]
    %v435 = vld [vmem:[#allocation7 + $0x180] sm:$0xff]
    %v436 = vld [vmem:[#allocation7 + $0x188] sm:$0xff]
    %v437 = vld [vmem:[#allocation7 + $0x190] sm:$0xff]
    %v438 = vld [vmem:[#allocation7 + $0x198] sm:$0xff]
    %v439 = vld [vmem:[#allocation7 + $0x1a0] sm:$0xff]
    %v440 = vld [vmem:[#allocation7 + $0x1a8] sm:$0xff]
    %v441 = vld [vmem:[#allocation7 + $0x1b0] sm:$0xff]
    %v442 = vld [vmem:[#allocation7 + $0x1b8] sm:$0xff]
    %v443 = vld [vmem:[#allocation7 + $0x1c0] sm:$0xff]
    %v444 = vld [vmem:[#allocation7 + $0x1c8] sm:$0xff]
    %v445 = vld [vmem:[#allocation7 + $0x1d0] sm:$0xff]
    %v446 = vld [vmem:[#allocation7 + $0x1d8] sm:$0xff]
    %v447 = vld [vmem:[#allocation7 + $0x1e0] sm:$0xff]
    %v448 = vld [vmem:[#allocation7 + $0x1e8] sm:$0xff]
    %v449 = vld [vmem:[#allocation7 + $0x1f0] sm:$0xff]
    %v450 = vld [vmem:[#allocation7 + $0x1f8] sm:$0xff]
    %v451 = vld [vmem:[%s6] sm:$0x1]
    %v453 = vlaneseq
    %v454 = vshrl.u32 %v453, 7
    %v455 = vsub.s32 0, %v454
    %v456 = vrot.slane %v451, %v455
    %458 = vmatprep.subr.mxu0 0.0
    %459 = vmatpush1.msra.mxu0 %v387
    %460 = vmatprep.subr.mxu0 0.0
    %461 = vmatpush1.msra.mxu0 %v388
    %462 = vmatprep.subr.mxu0 0.0
    %463 = vmatpush1.msra.mxu0 %v389
    %464 = vmatprep.subr.mxu0 0.0
    %465 = vmatpush1.msra.mxu0 %v390
    %466 = vmatprep.subr.mxu0 0.0
    %467 = vmatpush1.msra.mxu0 %v391
    %468 = vmatprep.subr.mxu0 0.0
    %469 = vmatpush1.msra.mxu0 %v392
    %470 = vmatprep.subr.mxu0 0.0
    %471 = vmatpush1.msra.mxu0 %v393
    %472 = vmatprep.subr.mxu0 0.0
    %473 = vmatpush1.msra.mxu0 %v394
    %474 = vmatprep.subr.mxu0 0.0
    %475 = vmatpush1.msra.mxu0 %v395
    %476 = vmatprep.subr.mxu0 0.0
    %477 = vmatpush1.msra.mxu0 %v396
    %478 = vmatprep.subr.mxu0 0.0
    %479 = vmatpush1.msra.mxu0 %v397
    %480 = vmatprep.subr.mxu0 0.0
    %481 = vmatpush1.msra.mxu0 %v398
    %482 = vmatprep.subr.mxu0 0.0
    %483 = vmatpush1.msra.mxu0 %v399
    %484 = vmatprep.subr.mxu0 0.0
    %485 = vmatpush1.msra.mxu0 %v400
    %486 = vmatprep.subr.mxu0 0.0
    %487 = vmatpush1.msra.mxu0 %v401
    %488 = vmatprep.subr.mxu0 0.0
    %489 = vmatpush1.msra.mxu0 %v402
    %490 = vmatprep.subr.mxu0 0.0
    %491 = vmatpush1.msra.mxu0 %v403
    %492 = vmatprep.subr.mxu0 0.0
    %493 = vmatpush1.msra.mxu0 %v404
    %494 = vmatprep.subr.mxu0 0.0
    %495 = vmatpush1.msra.mxu0 %v405
    %496 = vmatprep.subr.mxu0 0.0
    %497 = vmatpush1.msra.mxu0 %v406
    %498 = vmatprep.subr.mxu0 0.0
    %499 = vmatpush1.msra.mxu0 %v407
    %500 = vmatprep.subr.mxu0 0.0
    %501 = vmatpush1.msra.mxu0 %v408
    %502 = vmatprep.subr.mxu0 0.0
    %503 = vmatpush1.msra.mxu0 %v409
    %504 = vmatprep.subr.mxu0 0.0
    %505 = vmatpush1.msra.mxu0 %v410
    %506 = vmatprep.subr.mxu0 0.0
    %507 = vmatpush1.msra.mxu0 %v411
    %508 = vmatprep.subr.mxu0 0.0
    %509 = vmatpush1.msra.mxu0 %v412
    %510 = vmatprep.subr.mxu0 0.0
    %511 = vmatpush1.msra.mxu0 %v413
    %512 = vmatprep.subr.mxu0 0.0
    %513 = vmatpush1.msra.mxu0 %v414
    %514 = vmatprep.subr.mxu0 0.0
    %515 = vmatpush1.msra.mxu0 %v415
    %516 = vmatprep.subr.mxu0 0.0
    %517 = vmatpush1.msra.mxu0 %v416
    %518 = vmatprep.subr.mxu0 0.0
    %519 = vmatpush1.msra.mxu0 %v417
    %520 = vmatprep.subr.mxu0 0.0
    %521 = vmatpush1.msra.mxu0 %v418
    %522 = vmatprep.mubr.f32.mxu0 %v384
    %523 = vmatmul.mubr.f32.gmra.mrb[0].mxu0 %v383
    %v524 = vpop.f32.mrb[0].mxu0
    %v525 = vadd.f32 %v456, %v524
    %v526 = vpop.f32.mrb[0].mxu0
    %527 = vdwg.mxu0
    %528 = vmatprep.subr.mxu0 0.0
    %529 = vmatpush1.msra.mxu0 %v419
    %530 = vmatprep.subr.mxu0 0.0
    %531 = vmatpush1.msra.mxu0 %v420
    %532 = vmatprep.subr.mxu0 0.0
    %533 = vmatpush1.msra.mxu0 %v421
    %534 = vmatprep.subr.mxu0 0.0
    %535 = vmatpush1.msra.mxu0 %v422
    %536 = vmatprep.subr.mxu0 0.0
    %537 = vmatpush1.msra.mxu0 %v423
    %538 = vmatprep.subr.mxu0 0.0
    %539 = vmatpush1.msra.mxu0 %v424
    %540 = vmatprep.subr.mxu0 0.0
    %541 = vmatpush1.msra.mxu0 %v425
    %542 = vmatprep.subr.mxu0 0.0
    %543 = vmatpush1.msra.mxu0 %v426
    %544 = vmatprep.subr.mxu0 0.0
    %545 = vmatpush1.msra.mxu0 %v427
    %546 = vmatprep.subr.mxu0 0.0
    %547 = vmatpush1.msra.mxu0 %v428
    %548 = vmatprep.subr.mxu0 0.0
    %549 = vmatpush1.msra.mxu0 %v429
    %550 = vmatprep.subr.mxu0 0.0
    %551 = vmatpush1.msra.mxu0 %v430
    %552 = vmatprep.subr.mxu0 0.0
    %553 = vmatpush1.msra.mxu0 %v431
    %554 = vmatprep.subr.mxu0 0.0
    %555 = vmatpush1.msra.mxu0 %v432
    %556 = vmatprep.subr.mxu0 0.0
    %557 = vmatpush1.msra.mxu0 %v433
    %558 = vmatprep.subr.mxu0 0.0
    %559 = vmatpush1.msra.mxu0 %v434
    %560 = vmatprep.subr.mxu0 0.0
    %561 = vmatpush1.msra.mxu0 %v435
    %562 = vmatprep.subr.mxu0 0.0
    %563 = vmatpush1.msra.mxu0 %v436
    %564 = vmatprep.subr.mxu0 0.0
    %565 = vmatpush1.msra.mxu0 %v437
    %566 = vmatprep.subr.mxu0 0.0
    %567 = vmatpush1.msra.mxu0 %v438
    %568 = vmatprep.subr.mxu0 0.0
    %569 = vmatpush1.msra.mxu0 %v439
    %570 = vmatprep.subr.mxu0 0.0
    %571 = vmatpush1.msra.mxu0 %v440
    %572 = vmatprep.subr.mxu0 0.0
    %573 = vmatpush1.msra.mxu0 %v441
    %574 = vmatprep.subr.mxu0 0.0
    %575 = vmatpush1.msra.mxu0 %v442
    %576 = vmatprep.subr.mxu0 0.0
    %577 = vmatpush1.msra.mxu0 %v443
    %578 = vmatprep.subr.mxu0 0.0
    %579 = vmatpush1.msra.mxu0 %v444
    %580 = vmatprep.subr.mxu0 0.0
    %581 = vmatpush1.msra.mxu0 %v445
    %582 = vmatprep.subr.mxu0 0.0
    %583 = vmatpush1.msra.mxu0 %v446
    %584 = vmatprep.subr.mxu0 0.0
    %585 = vmatpush1.msra.mxu0 %v447
    %586 = vmatprep.subr.mxu0 0.0
    %587 = vmatpush1.msra.mxu0 %v448
    %588 = vmatprep.subr.mxu0 0.0
    %589 = vmatpush1.msra.mxu0 %v449
    %590 = vmatprep.subr.mxu0 0.0
    %591 = vmatpush1.msra.mxu0 %v450
    %592 = vmatprep.mubr.f32.mxu0 %v386
    %593 = vmatmul.mubr.f32.gmra.mrb[0].mxu0 %v385
    %v594 = vpop.f32.mrb[0].mxu0
    %v595 = vadd.f32 %v525, %v594
    %v596 = vpop.f32.mrb[0].mxu0
    %597 = vdwg.mxu0
    %598 = vst [vmem:[#allocation8] sm:$0xff] %v595
    // Predicated region
    $region42: #{actor_forward.1} parent=1 // pred_check
      _
    $region43: #{actor_forward.1} parent=1 // pred_check_branch
      %600 = sbr.rel (0) target = $region45
    $region44: #{actor_forward.1} parent=1 // pred_region
      %s602 = ssub.s32 128, 128
      %603 = vsyncadd [#allocation4], %s602
      %s605 = sshll.u32 [#allocation8], 4
      %s606 = int_to_ptr.vmem [resolvable:$true] %s605
      %608 = dma.vmem_to_hbm [thread:$0]  %s606, 128, %s7, [#allocation4]
    $region45: #{actor_forward.1} parent=1 // pred_fallthru
      _
    // Predicated region
    $region46: #{actor_forward.1} parent=1 // pred_check
      _
    $region47: #{actor_forward.1} parent=1 // pred_check_branch
      %610 = sbr.rel (0) target = $region49
    $region48: #{actor_forward.1} parent=1 // pred_region
      %611 = dma.done [#allocation4], 128
    $region49: #{actor_forward.1} parent=1 // pred_fallthru
      _
    %612 = vsyncpa [#allocation3], 1
    %613 = vsyncpa [#allocation6], 1
    %614 = vsyncpa [#allocation4], 1

</llo_original>
